<compile_context>
chip_gen: v7x
topology: tpu7x:2x2x1
jax: 0.10.0
libtpu: 0.0.40
codegen_flags: <defaults>
</compile_context>

<pallas_src>
import jax
import jax.numpy as jnp
from jax.experimental import pallas as pl
from jax.experimental.pallas import tpu as pltpu


OUT_PAD = 128  # lane-dense width of the padded logits slab


# ------------------------------ Pallas kernels ------------------------------ #

def _sage_layer1_kernel(a_ref, p_ref, r_ref, h_ref, acc_ref):
    """h[i_tile] = relu( sum_k A[i_tile,k_tile] @ P[k_tile] + R[i_tile] )

    a_ref : [TM, TK]  bf16 row-normalized adjacency block
    p_ref : [TK, H]   bf16 pre-projected neighbour features (X @ W1l)
    r_ref : [TM, H]   f32  pre-projected root term (X @ W1r + b1)
    h_ref : [TM, H]   bf16 hidden-activation output block
    acc_ref:[TM, H]   f32  aggregation accumulator (VMEM scratch)
    """
    k = pl.program_id(1)

    @pl.when(k == 0)
    def _init():
        acc_ref[...] = jnp.zeros_like(acc_ref)

    acc_ref[...] += jnp.dot(a_ref[...], p_ref[...],
                            preferred_element_type=jnp.float32)

    @pl.when(k == pl.num_programs(1) - 1)
    def _finalize():
        h_ref[...] = jnp.maximum(acc_ref[...] + r_ref[...], 0.0).astype(h_ref.dtype)


def _sage_layer2_kernel(a_ref, hs_ref, hd_ref, w2l_ref, w2r_ref, b2_ref,
                        o_ref, acc_ref):
    """out[i_tile] = (sum_k A[i,k] @ h[k]) @ W2l + h[i] @ W2r + b2

    a_ref  : [TM, TK]      bf16 adjacency block
    hs_ref : [TK, H]       bf16 hidden activations, source rows
    hd_ref : [TM, H]       bf16 hidden activations, destination rows (root term)
    w2l_ref/w2r_ref: [H, 128] f32 (output lanes zero-padded to 128)
    b2_ref : [1, 128]      f32
    o_ref  : [TM, 128]     f32 lane-dense padded logits block
    acc_ref: [TM, H]       f32 aggregation accumulator (VMEM scratch)
    """
    k = pl.program_id(1)

    @pl.when(k == 0)
    def _init():
        acc_ref[...] = jnp.zeros_like(acc_ref)

    acc_ref[...] += jnp.dot(a_ref[...], hs_ref[...],
                            preferred_element_type=jnp.float32)

    @pl.when(k == pl.num_programs(1) - 1)
    def _finalize():
        out = (jnp.dot(acc_ref[...], w2l_ref[...],
                       preferred_element_type=jnp.float32)
               + jnp.dot(hd_ref[...].astype(jnp.float32), w2r_ref[...],
                         preferred_element_type=jnp.float32)
               + b2_ref[...])
        o_ref[...] = out.astype(o_ref.dtype)


# --------------------------------- Wrapper --------------------------------- #

def _round_up(x, m):
    return (x + m - 1) // m * m


def _vmem_limit_bytes():
    # ~96 MiB on 128-MiB-VMEM parts (v5e/v6e), ~48 MiB on v7x (64 MiB physical).
    try:
        cap = pltpu.get_tpu_info().vmem_capacity_bytes
        return int(min(96 * 1024 * 1024, cap * 3 // 4))
    except Exception:  # conservative fallback, safe on every generation
        return 48 * 1024 * 1024


def build_mean_adjacency(edge_index, num_nodes):
    """Dense row-normalized adjacency A[N_dst, N_src] for mean aggregation.

    edge_index: [2, E] int32, row 0 = source j, row 1 = target i.
    A[i, j] = 1 / in_degree(i) if (j -> i) is an edge else 0.
    Isolated targets (in-degree 0) aggregate to 0, matching PyG mean aggr.
    """
    src, dst = edge_index[0], edge_index[1]
    adj = jnp.zeros((num_nodes, num_nodes), jnp.float32)
    adj = adj.at[dst, src].add(1.0)
    deg = jnp.sum(adj, axis=1, keepdims=True)
    return adj / jnp.maximum(deg, 1.0)


def gnn_forward(x, edge_index, params):
    n, fin = x.shape
    hid = params["W1l"].shape[1]
    fout = params["W2l"].shape[1]

    # Destination-row tile: biggest that keeps per-core VMEM comfortable.
    tile_m = min(512, _round_up(n, 128))
    n_pad = _round_up(n, tile_m)
    # Rectangular A blocks: widen the contraction axis (up to 4x / 2048) to
    # amortize the per-grid-step overhead when the padded size allows it.
    tile_k = tile_m
    for mult in (4, 2):
        cand = tile_m * mult
        if cand <= 2048 and n_pad % cand == 0:
            tile_k = cand
            break
    ni = n_pad // tile_m
    nk = n_pad // tile_k

    # bf16 adjacency stream (dominant HBM traffic); padded rows/cols are zero.
    a = build_mean_adjacency(edge_index, n)
    a_pad = (jnp.zeros((n_pad, n_pad), jnp.float32)
             .at[:n, :n].set(a).astype(jnp.bfloat16))
    x_pad = jnp.zeros((n_pad, fin), jnp.float32).at[:n, :].set(x)

    # Pre-project layer 1 on the host (tiny XLA matmuls) -> kernel 1 is a pure
    # A-stream: P for the aggregation matmul (bf16), R for the root term (f32).
    p1 = (x_pad @ params["W1l"]).astype(jnp.bfloat16)
    r1 = x_pad @ params["W1r"] + params["b1"].reshape(1, hid)

    # Lane-pad layer-2 output weights/bias to 128 so the only final store is a
    # full-width unmasked (TM, 128) block.
    w2l_p = jnp.zeros((hid, OUT_PAD), jnp.float32).at[:, :fout].set(params["W2l"])
    w2r_p = jnp.zeros((hid, OUT_PAD), jnp.float32).at[:, :fout].set(params["W2r"])
    b2_p = jnp.zeros((1, OUT_PAD), jnp.float32).at[:, :fout].set(params["b2"])

    vmem_limit = _vmem_limit_bytes()
    compiler_params = pltpu.CompilerParams(
        dimension_semantics=("parallel", "arbitrary"),
        vmem_limit_bytes=vmem_limit,
    )

    # ------------------ layer 1: h = relu(A @ P + R), bf16 ------------------ #
    h = pl.pallas_call(
        _sage_layer1_kernel,
        out_shape=jax.ShapeDtypeStruct((n_pad, hid), jnp.bfloat16),
        grid=(ni, nk),
        in_specs=[
            pl.BlockSpec((tile_m, tile_k), lambda i, k: (i, k)),  # A block
            pl.BlockSpec((tile_k, hid), lambda i, k: (k, 0)),     # P src rows
            pl.BlockSpec((tile_m, hid), lambda i, k: (i, 0)),     # R dst rows
        ],
        out_specs=pl.BlockSpec((tile_m, hid), lambda i, k: (i, 0)),
        scratch_shapes=[pltpu.VMEM((tile_m, hid), jnp.float32)],
        compiler_params=compiler_params,
        cost_estimate=pl.CostEstimate(
            flops=int(2 * n_pad * n_pad * hid),
            transcendentals=0,
            bytes_accessed=int(2 * n_pad * n_pad          # bf16 A, read once
                               + 2 * ni * n_pad * hid     # P re-read per dst tile
                               + 4 * n_pad * hid          # R (f32)
                               + 2 * n_pad * hid),        # h writeback (bf16)
        ),
    )(a_pad, p1, r1)

    # --------------- layer 2: out = (A @ h) @ W2l + h @ W2r + b2 ------------ #
    out_pad = pl.pallas_call(
        _sage_layer2_kernel,
        out_shape=jax.ShapeDtypeStruct((n_pad, OUT_PAD), jnp.float32),
        grid=(ni, nk),
        in_specs=[
            pl.BlockSpec((tile_m, tile_k), lambda i, k: (i, k)),   # A block
            pl.BlockSpec((tile_k, hid), lambda i, k: (k, 0)),      # h src rows
            pl.BlockSpec((tile_m, hid), lambda i, k: (i, 0)),      # h dst rows
            pl.BlockSpec((hid, OUT_PAD), lambda i, k: (0, 0)),     # W2_l (padded)
            pl.BlockSpec((hid, OUT_PAD), lambda i, k: (0, 0)),     # W2_r (padded)
            pl.BlockSpec((1, OUT_PAD), lambda i, k: (0, 0)),       # b2  (padded)
        ],
        out_specs=pl.BlockSpec((tile_m, OUT_PAD), lambda i, k: (i, 0)),
        scratch_shapes=[pltpu.VMEM((tile_m, hid), jnp.float32)],
        compiler_params=compiler_params,
        cost_estimate=pl.CostEstimate(
            flops=int(2 * n_pad * n_pad * hid + 4 * n_pad * hid * OUT_PAD),
            transcendentals=0,
            bytes_accessed=int(2 * n_pad * n_pad            # bf16 A, read once
                               + 2 * ni * n_pad * hid       # h src re-reads
                               + 2 * n_pad * hid            # h dst rows
                               + 4 * n_pad * OUT_PAD        # padded logits
                               + 4 * (2 * hid * OUT_PAD + OUT_PAD)),
        ),
    )(a_pad, h, h, w2l_p, w2r_p, b2_p)

    return out_pad[:n, :fout]


def gnn_reference(x, edge_index, params):
    """Plain-JAX f32 reference for verification."""
    n = x.shape[0]
    a = build_mean_adjacency(edge_index, n)
    h = (a @ x) @ params["W1l"] + x @ params["W1r"] + params["b1"]
    h = jnp.maximum(h, 0.0)
    return (a @ h) @ params["W2l"] + h @ params["W2r"] + params["b2"]


def init_params(key, in_feats, hidden=16, out_feats=2):
    ks = jax.random.split(key, 4)

    def glorot(k, fan_in, fan_out):
        lim = jnp.sqrt(6.0 / (fan_in + fan_out))
        return jax.random.uniform(k, (fan_in, fan_out), jnp.float32, -lim, lim)

    return {
        "W1l": glorot(ks[0], in_feats, hidden),
        "W1r": glorot(ks[1], in_feats, hidden),
        "b1": jnp.zeros((hidden,), jnp.float32),
        "W2l": glorot(ks[2], hidden, out_feats),
        "W2r": glorot(ks[3], hidden, out_feats),
        "b2": jnp.zeros((out_feats,), jnp.float32),
    }


# ----------------------------------- Main ----------------------------------- #

if __name__ == "__main__":
    key = jax.random.PRNGKey(0)
    k_x, k_e, k_p = jax.random.split(key, 3)

    num_nodes = 16
    in_feats = 8
    num_edges = 32

    x = jax.random.normal(k_x, (num_nodes, in_feats), jnp.float32)
    edge_index = jax.random.randint(
        k_e, (2, num_edges), 0, num_nodes, dtype=jnp.int32
    )
    params = init_params(k_p, in_feats)

    out = gnn_forward(x, edge_index, params)
    out = jax.block_until_ready(out)

    ref = gnn_reference(x, edge_index, params)
    assert out.shape == (num_nodes, 2)
    # bf16 adjacency / activation streams with f32 accumulation -> loosened tol.
    assert jnp.allclose(out, ref, atol=5e-2, rtol=5e-2), (
        float(jnp.max(jnp.abs(out - ref))))

    print("KERNEL_OK")
</pallas_src>

<mosaic_0001>
module attributes {stable_mosaic.version = 11 : i64} {
  func.func @_sage_layer1_kernel(%arg0: i32, %arg1: i32, %arg2: memref<128x128xbf16, #tpu.memory_space<vmem>>, %arg3: memref<128x16xbf16, #tpu.memory_space<vmem>>, %arg4: memref<128x16xf32, #tpu.memory_space<vmem>>, %arg5: memref<128x16xbf16, #tpu.memory_space<vmem>>, %arg6: memref<128x16xf32, #tpu.memory_space<vmem>>) attributes {dimension_semantics = [#tpu.dimension_semantics<parallel>, #tpu.dimension_semantics<arbitrary>], iteration_bounds = array<i64: 1, 1>, scalar_prefetch = 0 : i64, scratch_operands = 1 : i64, tpu.core_type = #tpu.core_type<tc>, window_params = [{transform_indices = @transform_0, window_bounds = array<i64: 128, 128>}, {transform_indices = @transform_1, window_bounds = array<i64: 128, 16>}, {transform_indices = @transform_2, window_bounds = array<i64: 128, 16>}, {transform_indices = @transform_3, window_bounds = array<i64: 128, 16>}]} {
    %c0_i32 = arith.constant 0 : i32
    %0 = arith.cmpi eq, %arg1, %c0_i32 : i32
    %1 = arith.extui %0 : i1 to i32
    %c0_i32_0 = arith.constant 0 : i32
    %2 = arith.cmpi ne, %1, %c0_i32_0 : i32
    scf.if %2 {
      %cst_10 = arith.constant 0.000000e+00 : f32
      %12 = vector.broadcast %cst_10 : f32 to vector<128x16xf32>
      %c0_11 = arith.constant 0 : index
      %c0_12 = arith.constant 0 : index
      %13 = vector.load %arg6[%c0_11, %c0_12] : memref<128x16xf32, #tpu.memory_space<vmem>>, vector<128x16xf32>
      tpu.vector_store %arg6[%c0_11, %c0_12], %12 {strides = array<i32>} : memref<128x16xf32, #tpu.memory_space<vmem>>, vector<128x16xf32>,
    } else {
    }
    %c0 = arith.constant 0 : index
    %c0_1 = arith.constant 0 : index
    %3 = vector.load %arg6[%c0, %c0_1] : memref<128x16xf32, #tpu.memory_space<vmem>>, vector<128x16xf32>
    %c0_2 = arith.constant 0 : index
    %c0_3 = arith.constant 0 : index
    %4 = vector.load %arg2[%c0_2, %c0_3] : memref<128x128xbf16, #tpu.memory_space<vmem>>, vector<128x128xbf16>
    %c0_4 = arith.constant 0 : index
    %c0_5 = arith.constant 0 : index
    %5 = vector.load %arg3[%c0_4, %c0_5] : memref<128x16xbf16, #tpu.memory_space<vmem>>, vector<128x16xbf16>
    %cst = arith.constant dense<0.000000e+00> : vector<128x16xf32>
    %6 = tpu.matmul %4, %5, %cst {dimension_numbers = #tpu.dot_dimension_numbers<[1], [0], [0], [1], [0, 0, 1, 1], [], []>} : vector<128x128xbf16>, vector<128x16xbf16>, vector<128x16xf32> -> vector<128x16xf32>
    %7 = arith.addf %3, %6 : vector<128x16xf32>
    %c0_6 = arith.constant 0 : index
    %c0_7 = arith.constant 0 : index
    %8 = vector.load %arg6[%c0_6, %c0_7] : memref<128x16xf32, #tpu.memory_space<vmem>>, vector<128x16xf32>
    tpu.vector_store %arg6[%c0_6, %c0_7], %7 {strides = array<i32>} : memref<128x16xf32, #tpu.memory_space<vmem>>, vector<128x16xf32>,
    %c0_i32_8 = arith.constant 0 : i32
    %9 = arith.cmpi eq, %arg1, %c0_i32_8 : i32
    %10 = arith.extui %9 : i1 to i32
    %c0_i32_9 = arith.constant 0 : i32
    %11 = arith.cmpi ne, %10, %c0_i32_9 : i32
    scf.if %11 {
      %c0_10 = arith.constant 0 : index
      %c0_11 = arith.constant 0 : index
      %12 = vector.load %arg6[%c0_10, %c0_11] : memref<128x16xf32, #tpu.memory_space<vmem>>, vector<128x16xf32>
      %c0_12 = arith.constant 0 : index
      %c0_13 = arith.constant 0 : index
      %13 = vector.load %arg4[%c0_12, %c0_13] : memref<128x16xf32, #tpu.memory_space<vmem>>, vector<128x16xf32>
      %14 = arith.addf %12, %13 : vector<128x16xf32>
      %cst_14 = arith.constant 0.000000e+00 : f32
      %15 = vector.broadcast %cst_14 : f32 to vector<128x16xf32>
      %16 = arith.maximumf %14, %15 : vector<128x16xf32>
      %17 = arith.truncf %16 : vector<128x16xf32> to vector<128x16xbf16>
      %c0_15 = arith.constant 0 : index
      %c0_16 = arith.constant 0 : index
      %18 = vector.load %arg5[%c0_15, %c0_16] : memref<128x16xbf16, #tpu.memory_space<vmem>>, vector<128x16xbf16>
      tpu.vector_store %arg5[%c0_15, %c0_16], %17 {strides = array<i32>} : memref<128x16xbf16, #tpu.memory_space<vmem>>, vector<128x16xbf16>,
    } else {
    }
    return
  }
  func.func @transform_0(%arg0: i32, %arg1: i32) -> (i32, i32) {
    %c0_i32 = arith.constant 0 : i32
    return %arg0, %arg1 : i32, i32
  }
  func.func @transform_1(%arg0: i32, %arg1: i32) -> (i32, i32) {
    %c0_i32 = arith.constant 0 : i32
    %c0_i32_0 = arith.constant 0 : i32
    return %arg1, %c0_i32 : i32, i32
  }
  func.func @transform_2(%arg0: i32, %arg1: i32) -> (i32, i32) {
    %c0_i32 = arith.constant 0 : i32
    %c0_i32_0 = arith.constant 0 : i32
    return %arg0, %c0_i32 : i32, i32
  }
  func.func @transform_3(%arg0: i32, %arg1: i32) -> (i32, i32) {
    %c0_i32 = arith.constant 0 : i32
    %c0_i32_0 = arith.constant 0 : i32
    return %arg0, %c0_i32 : i32, i32
  }
}

</mosaic_0001>

<llo_original>
// kernel: tpu_custom_call.1
$region0: #{tpu_custom_call.1}
  #allocation0 [shape = 'u32[]', space=smem, size = 0x4, offset = 0x4, fixed_abs, tag = 'smem constant byte address 0x4 - core index']
  #allocation1 [shape = 'u32[144,128]{1,0:T(1,128)}', space=vmem, size = 0x12000, scoped, tag = 'internal scratch']
  #allocation2 [shape = 'f32[128,16]{1,0:T(8,128)}', space=vmem, size = 0x10000, scoped, tag = 'scratch operand']
  %s0 = inlined_call_operand.vmem [shape: bf16[128,128], index: 0, kind: input, shape index: {}]
  %s1 = inlined_call_operand.vmem [shape: bf16[128,16], index: 1, kind: input, shape index: {}]
  %s2 = inlined_call_operand.vmem [shape: f32[128,16], index: 2, kind: input, shape index: {}]
  %s3 = inlined_call_operand.vmem [shape: bf16[128,16], index: 3, kind: output, shape index: {}]
  %s4 = sld [smem:[#allocation0]]
  $region30: #{tpu_custom_call.1} parent=0
    _
  %s6 = ssub.s32 1, %s4
  %s7 = scalar_select 0, %s6, %s4
  // Predicated region
  $region2: #{tpu_custom_call.1} parent=0 // pred_check
    _
  $region3: #{tpu_custom_call.1} parent=0 // pred_check_branch
    %9 = sbr.rel (0) target = $region5
  $region4: #{tpu_custom_call.1} parent=0 // pred_region
    _
  $region5: #{tpu_custom_call.1} parent=0 // pred_fallthru
    _
  // Predicated region
  $region6: #{tpu_custom_call.1} parent=0 // pred_check
    _
  $region7: #{tpu_custom_call.1} parent=0 // pred_check_branch
    %11 = sbr.rel (0) target = $region9
  $region8: #{tpu_custom_call.1} parent=0 // pred_region
    _
  $region9: #{tpu_custom_call.1} parent=0 // pred_fallthru
    _
  // Predicated region
  $region10: #{tpu_custom_call.1} parent=0 // pred_check
    _
  $region11: #{tpu_custom_call.1} parent=0 // pred_check_branch
    %13 = sbr.rel (0) target = $region13
  $region12: #{tpu_custom_call.1} parent=0 // pred_region
    _
  $region13: #{tpu_custom_call.1} parent=0 // pred_fallthru
    _
  %p15 = scmp.eq.s32.totalorder 0, 0
  // Predicated region
  $region14: #{tpu_custom_call.1} parent=0 // pred_check
    %p16 = pneg %p15
  $region15: #{tpu_custom_call.1} parent=0 // pred_check_branch
    %18 = sbr.rel (%p16) target = $region17
  $region16: #{tpu_custom_call.1} parent=0 // pred_region
    %vm19 = vcmask 130048
    %20 = vst.msk [vmem:[#allocation2] sm:$0xff] %vm19, 0.0
    %21 = vst.msk [vmem:[#allocation2 + $0x8] sm:$0xff] %vm19, 0.0
    %22 = vst.msk [vmem:[#allocation2 + $0x10] sm:$0xff] %vm19, 0.0
    %23 = vst.msk [vmem:[#allocation2 + $0x18] sm:$0xff] %vm19, 0.0
    %24 = vst.msk [vmem:[#allocation2 + $0x20] sm:$0xff] %vm19, 0.0
    %25 = vst.msk [vmem:[#allocation2 + $0x28] sm:$0xff] %vm19, 0.0
    %26 = vst.msk [vmem:[#allocation2 + $0x30] sm:$0xff] %vm19, 0.0
    %27 = vst.msk [vmem:[#allocation2 + $0x38] sm:$0xff] %vm19, 0.0
    %28 = vst.msk [vmem:[#allocation2 + $0x40] sm:$0xff] %vm19, 0.0
    %29 = vst.msk [vmem:[#allocation2 + $0x48] sm:$0xff] %vm19, 0.0
    %30 = vst.msk [vmem:[#allocation2 + $0x50] sm:$0xff] %vm19, 0.0
    %31 = vst.msk [vmem:[#allocation2 + $0x58] sm:$0xff] %vm19, 0.0
    %32 = vst.msk [vmem:[#allocation2 + $0x60] sm:$0xff] %vm19, 0.0
    %33 = vst.msk [vmem:[#allocation2 + $0x68] sm:$0xff] %vm19, 0.0
    %34 = vst.msk [vmem:[#allocation2 + $0x70] sm:$0xff] %vm19, 0.0
    %35 = vst.msk [vmem:[#allocation2 + $0x78] sm:$0xff] %vm19, 0.0
  $region17: #{tpu_custom_call.1} parent=0 // pred_fallthru
    _
  %v36 = vld [vmem:[#allocation2] sm:$0xff]
  %v37 = vld [vmem:[#allocation2 + $0x8] sm:$0xff]
  %v38 = vld [vmem:[#allocation2 + $0x10] sm:$0xff]
  %v39 = vld [vmem:[#allocation2 + $0x18] sm:$0xff]
  %v40 = vld [vmem:[#allocation2 + $0x20] sm:$0xff]
  %v41 = vld [vmem:[#allocation2 + $0x28] sm:$0xff]
  %v42 = vld [vmem:[#allocation2 + $0x30] sm:$0xff]
  %v43 = vld [vmem:[#allocation2 + $0x38] sm:$0xff]
  %v44 = vld [vmem:[#allocation2 + $0x40] sm:$0xff]
  %v45 = vld [vmem:[#allocation2 + $0x48] sm:$0xff]
  %v46 = vld [vmem:[#allocation2 + $0x50] sm:$0xff]
  %v47 = vld [vmem:[#allocation2 + $0x58] sm:$0xff]
  %v48 = vld [vmem:[#allocation2 + $0x60] sm:$0xff]
  %v49 = vld [vmem:[#allocation2 + $0x68] sm:$0xff]
  %v50 = vld [vmem:[#allocation2 + $0x70] sm:$0xff]
  %v51 = vld [vmem:[#allocation2 + $0x78] sm:$0xff]
  %v52 = vld [vmem:[%s0] sm:$0xf]
  %v53 = vld [vmem:[%s0 + $0x4] sm:$0xf]
  %v54 = vld [vmem:[%s0 + $0x8] sm:$0xf]
  %v55 = vld [vmem:[%s0 + $0xc] sm:$0xf]
  %v56 = vld [vmem:[%s0 + $0x10] sm:$0xf]
  %v57 = vld [vmem:[%s0 + $0x14] sm:$0xf]
  %v58 = vld [vmem:[%s0 + $0x18] sm:$0xf]
  %v59 = vld [vmem:[%s0 + $0x1c] sm:$0xf]
  %v60 = vld [vmem:[%s0 + $0x20] sm:$0xf]
  %v61 = vld [vmem:[%s0 + $0x24] sm:$0xf]
  %v62 = vld [vmem:[%s0 + $0x28] sm:$0xf]
  %v63 = vld [vmem:[%s0 + $0x2c] sm:$0xf]
  %v64 = vld [vmem:[%s0 + $0x30] sm:$0xf]
  %v65 = vld [vmem:[%s0 + $0x34] sm:$0xf]
  %v66 = vld [vmem:[%s0 + $0x38] sm:$0xf]
  %v67 = vld [vmem:[%s0 + $0x3c] sm:$0xf]
  %v68 = vld [vmem:[%s1] sm:$0xf]
  %v69 = vld [vmem:[%s1 + $0x4] sm:$0xf]
  %v70 = vld [vmem:[%s1 + $0x8] sm:$0xf]
  %v71 = vld [vmem:[%s1 + $0xc] sm:$0xf]
  %v72 = vld [vmem:[%s1 + $0x10] sm:$0xf]
  %v73 = vld [vmem:[%s1 + $0x14] sm:$0xf]
  %v74 = vld [vmem:[%s1 + $0x18] sm:$0xf]
  %v75 = vld [vmem:[%s1 + $0x1c] sm:$0xf]
  %v76 = vld [vmem:[%s1 + $0x20] sm:$0xf]
  %v77 = vld [vmem:[%s1 + $0x24] sm:$0xf]
  %v78 = vld [vmem:[%s1 + $0x28] sm:$0xf]
  %v79 = vld [vmem:[%s1 + $0x2c] sm:$0xf]
  %v80 = vld [vmem:[%s1 + $0x30] sm:$0xf]
  %v81 = vld [vmem:[%s1 + $0x34] sm:$0xf]
  %v82 = vld [vmem:[%s1 + $0x38] sm:$0xf]
  %v83 = vld [vmem:[%s1 + $0x3c] sm:$0xf]
  %v100 = vunpack.c.l.b16 %v52
  %v101 = vunpack.c.l.b16 %v53
  %v102 = vunpack.c.l.b16 %v54
  %v103 = vunpack.c.l.b16 %v55
  %v104 = vunpack.c.l.b16 %v56
  %v105 = vunpack.c.l.b16 %v57
  %v106 = vunpack.c.l.b16 %v58
  %v107 = vunpack.c.l.b16 %v59
  %v108 = vunpack.c.l.b16 %v60
  %v109 = vunpack.c.l.b16 %v61
  %v110 = vunpack.c.l.b16 %v62
  %v111 = vunpack.c.l.b16 %v63
  %v112 = vunpack.c.l.b16 %v64
  %v113 = vunpack.c.l.b16 %v65
  %v114 = vunpack.c.l.b16 %v66
  %v115 = vunpack.c.l.b16 %v67
  %v116 = vpack.c.b16 %v101, %v100
  %v117 = vpack.c.b16 %v103, %v102
  %v118 = vpack.c.b16 %v105, %v104
  %v119 = vpack.c.b16 %v107, %v106
  %v120 = vpack.c.b16 %v109, %v108
  %v121 = vpack.c.b16 %v111, %v110
  %v122 = vpack.c.b16 %v113, %v112
  %v123 = vpack.c.b16 %v115, %v114
  %v148 = vunpack.c.l.b16 %v68
  %v149 = vunpack.c.l.b16 %v69
  %v150 = vunpack.c.l.b16 %v70
  %v151 = vunpack.c.l.b16 %v71
  %v152 = vunpack.c.l.b16 %v72
  %v153 = vunpack.c.l.b16 %v73
  %v154 = vunpack.c.l.b16 %v74
  %v155 = vunpack.c.l.b16 %v75
  %v156 = vunpack.c.l.b16 %v76
  %v157 = vunpack.c.l.b16 %v77
  %v158 = vunpack.c.l.b16 %v78
  %v159 = vunpack.c.l.b16 %v79
  %v160 = vunpack.c.l.b16 %v80
  %v161 = vunpack.c.l.b16 %v81
  %v162 = vunpack.c.l.b16 %v82
  %v163 = vunpack.c.l.b16 %v83
  %v164 = vpack.c.b16 %v149, %v148
  %v165 = vpack.c.b16 %v151, %v150
  %v166 = vpack.c.b16 %v153, %v152
  %v167 = vpack.c.b16 %v155, %v154
  %v168 = vpack.c.b16 %v157, %v156
  %v169 = vpack.c.b16 %v159, %v158
  %v170 = vpack.c.b16 %v161, %v160
  %v171 = vpack.c.b16 %v163, %v162
  %180 = vmatprep.subr.bf16.mxu0 0
  %181 = vmatpush1.bf16.msra.mxu0 %v164
  %182 = vmatprep.subr.bf16.mxu0 0
  %183 = vmatpush1.bf16.msra.mxu0 %v165
  %184 = vmatprep.subr.bf16.mxu0 0
  %185 = vmatpush1.bf16.msra.mxu0 %v166
  %186 = vmatprep.subr.bf16.mxu0 0
  %187 = vmatpush1.bf16.msra.mxu0 %v167
  %188 = vmatprep.subr.bf16.mxu0 0
  %189 = vmatpush1.bf16.msra.mxu0 %v168
  %190 = vmatprep.subr.bf16.mxu0 0
  %191 = vmatpush1.bf16.msra.mxu0 %v169
  %192 = vmatprep.subr.bf16.mxu0 0
  %193 = vmatpush1.bf16.msra.mxu0 %v170
  %194 = vmatprep.subr.bf16.mxu0 0
  %195 = vmatpush1.bf16.msra.mxu0 %v171
  %196 = vmatprep.subr.bf16.mxu0 0
  %197 = vmatpush1.bf16.msra.mxu0 0
  %198 = vmatprep.subr.bf16.mxu0 0
  %199 = vmatpush1.bf16.msra.mxu0 0
  %200 = vmatprep.subr.bf16.mxu0 0
  %201 = vmatpush1.bf16.msra.mxu0 0
  %202 = vmatprep.subr.bf16.mxu0 0
  %203 = vmatpush1.bf16.msra.mxu0 0
  %204 = vmatprep.subr.bf16.mxu0 0
  %205 = vmatpush1.bf16.msra.mxu0 0
  %206 = vmatprep.subr.bf16.mxu0 0
  %207 = vmatpush1.bf16.msra.mxu0 0
  %208 = vmatprep.subr.bf16.mxu0 0
  %209 = vmatpush1.bf16.msra.mxu0 0
  %210 = vmatprep.subr.bf16.mxu0 0
  %211 = vmatpush1.bf16.msra.mxu0 0
  %212 = vmatprep.mubr.bf16.mxu0 0
  %213 = vmatmul.mubr.bf16.gmra.mrb[0].mxu0 %v116
  %v214 = vpop.f32.mrb[0].mxu0
  %v215 = vadd.f32 0.0, %v214
  %v216 = vpop.f32.mrb[0].mxu0
  %v217 = vpop.f32.mrb[0].mxu0
  %v218 = vadd.f32 0.0, %v217
  %v219 = vpop.f32.mrb[0].mxu0
  %220 = vmatprep.mubr.bf16.mxu0 0
  %221 = vmatmul.mubr.bf16.gmra.mrb[0].mxu0 %v117
  %v222 = vpop.f32.mrb[0].mxu0
  %v223 = vadd.f32 0.0, %v222
  %v224 = vpop.f32.mrb[0].mxu0
  %v225 = vpop.f32.mrb[0].mxu0
  %v226 = vadd.f32 0.0, %v225
  %v227 = vpop.f32.mrb[0].mxu0
  %228 = vmatprep.mubr.bf16.mxu0 0
  %229 = vmatmul.mubr.bf16.gmra.mrb[0].mxu0 %v118
  %v230 = vpop.f32.mrb[0].mxu0
  %v231 = vadd.f32 0.0, %v230
  %v232 = vpop.f32.mrb[0].mxu0
  %v233 = vpop.f32.mrb[0].mxu0
  %v234 = vadd.f32 0.0, %v233
  %v235 = vpop.f32.mrb[0].mxu0
  %236 = vmatprep.mubr.bf16.mxu0 0
  %237 = vmatmul.mubr.bf16.gmra.mrb[0].mxu0 %v119
  %v238 = vpop.f32.mrb[0].mxu0
  %v239 = vadd.f32 0.0, %v238
  %v240 = vpop.f32.mrb[0].mxu0
  %v241 = vpop.f32.mrb[0].mxu0
  %v242 = vadd.f32 0.0, %v241
  %v243 = vpop.f32.mrb[0].mxu0
  %244 = vmatprep.mubr.bf16.mxu0 0
  %245 = vmatmul.mubr.bf16.gmra.mrb[0].mxu0 %v120
  %v246 = vpop.f32.mrb[0].mxu0
  %v247 = vadd.f32 0.0, %v246
  %v248 = vpop.f32.mrb[0].mxu0
  %v249 = vpop.f32.mrb[0].mxu0
  %v250 = vadd.f32 0.0, %v249
  %v251 = vpop.f32.mrb[0].mxu0
  %252 = vmatprep.mubr.bf16.mxu0 0
  %253 = vmatmul.mubr.bf16.gmra.mrb[0].mxu0 %v121
  %v254 = vpop.f32.mrb[0].mxu0
  %v255 = vadd.f32 0.0, %v254
  %v256 = vpop.f32.mrb[0].mxu0
  %v257 = vpop.f32.mrb[0].mxu0
  %v258 = vadd.f32 0.0, %v257
  %v259 = vpop.f32.mrb[0].mxu0
  %260 = vmatprep.mubr.bf16.mxu0 0
  %261 = vmatmul.mubr.bf16.gmra.mrb[0].mxu0 %v122
  %v262 = vpop.f32.mrb[0].mxu0
  %v263 = vadd.f32 0.0, %v262
  %v264 = vpop.f32.mrb[0].mxu0
  %v265 = vpop.f32.mrb[0].mxu0
  %v266 = vadd.f32 0.0, %v265
  %v267 = vpop.f32.mrb[0].mxu0
  %268 = vmatprep.mubr.bf16.mxu0 0
  %269 = vmatmul.mubr.bf16.gmra.mrb[0].mxu0 %v123
  %v270 = vpop.f32.mrb[0].mxu0
  %v271 = vadd.f32 0.0, %v270
  %v272 = vpop.f32.mrb[0].mxu0
  %v273 = vpop.f32.mrb[0].mxu0
  %v274 = vadd.f32 0.0, %v273
  %v275 = vpop.f32.mrb[0].mxu0
  %276 = vdwg.mxu0
  %v277 = vadd.f32 %v36, %v215
  %v278 = vadd.f32 %v37, %v218
  %v279 = vadd.f32 %v38, %v223
  %v280 = vadd.f32 %v39, %v226
  %v281 = vadd.f32 %v40, %v231
  %v282 = vadd.f32 %v41, %v234
  %v283 = vadd.f32 %v42, %v239
  %v284 = vadd.f32 %v43, %v242
  %v285 = vadd.f32 %v44, %v247
  %v286 = vadd.f32 %v45, %v250
  %v287 = vadd.f32 %v46, %v255
  %v288 = vadd.f32 %v47, %v258
  %v289 = vadd.f32 %v48, %v263
  %v290 = vadd.f32 %v49, %v266
  %v291 = vadd.f32 %v50, %v271
  %v292 = vadd.f32 %v51, %v274
  %vm293 = vcmask 130048
  %294 = vst.msk [vmem:[#allocation2] sm:$0xff] %vm293, %v277
  %295 = vst.msk [vmem:[#allocation2 + $0x8] sm:$0xff] %vm293, %v278
  %296 = vst.msk [vmem:[#allocation2 + $0x10] sm:$0xff] %vm293, %v279
  %297 = vst.msk [vmem:[#allocation2 + $0x18] sm:$0xff] %vm293, %v280
  %298 = vst.msk [vmem:[#allocation2 + $0x20] sm:$0xff] %vm293, %v281
  %299 = vst.msk [vmem:[#allocation2 + $0x28] sm:$0xff] %vm293, %v282
  %300 = vst.msk [vmem:[#allocation2 + $0x30] sm:$0xff] %vm293, %v283
  %301 = vst.msk [vmem:[#allocation2 + $0x38] sm:$0xff] %vm293, %v284
  %302 = vst.msk [vmem:[#allocation2 + $0x40] sm:$0xff] %vm293, %v285
  %303 = vst.msk [vmem:[#allocation2 + $0x48] sm:$0xff] %vm293, %v286
  %304 = vst.msk [vmem:[#allocation2 + $0x50] sm:$0xff] %vm293, %v287
  %305 = vst.msk [vmem:[#allocation2 + $0x58] sm:$0xff] %vm293, %v288
  %306 = vst.msk [vmem:[#allocation2 + $0x60] sm:$0xff] %vm293, %v289
  %307 = vst.msk [vmem:[#allocation2 + $0x68] sm:$0xff] %vm293, %v290
  %308 = vst.msk [vmem:[#allocation2 + $0x70] sm:$0xff] %vm293, %v291
  %309 = vst.msk [vmem:[#allocation2 + $0x78] sm:$0xff] %vm293, %v292
  // Predicated region
  $region18: #{tpu_custom_call.1} parent=0 // pred_check
    %p310 = pneg %p15
  $region19: #{tpu_custom_call.1} parent=0 // pred_check_branch
    %312 = sbr.rel (%p310) target = $region21
  $region20: #{tpu_custom_call.1} parent=0 // pred_region
    %v313 = vld [vmem:[#allocation2] sm:$0xff]
    %v314 = vld [vmem:[#allocation2 + $0x8] sm:$0xff]
    %v315 = vld [vmem:[#allocation2 + $0x10] sm:$0xff]
    %v316 = vld [vmem:[#allocation2 + $0x18] sm:$0xff]
    %v317 = vld [vmem:[#allocation2 + $0x20] sm:$0xff]
    %v318 = vld [vmem:[#allocation2 + $0x28] sm:$0xff]
    %v319 = vld [vmem:[#allocation2 + $0x30] sm:$0xff]
    %v320 = vld [vmem:[#allocation2 + $0x38] sm:$0xff]
    %v321 = vld [vmem:[#allocation2 + $0x40] sm:$0xff]
    %v322 = vld [vmem:[#allocation2 + $0x48] sm:$0xff]
    %v323 = vld [vmem:[#allocation2 + $0x50] sm:$0xff]
    %v324 = vld [vmem:[#allocation2 + $0x58] sm:$0xff]
    %v325 = vld [vmem:[#allocation2 + $0x60] sm:$0xff]
    %v326 = vld [vmem:[#allocation2 + $0x68] sm:$0xff]
    %v327 = vld [vmem:[#allocation2 + $0x70] sm:$0xff]
    %v328 = vld [vmem:[#allocation2 + $0x78] sm:$0xff]
    %v329 = vld [vmem:[%s2] sm:$0xff]
    %v330 = vld [vmem:[%s2 + $0x8] sm:$0xff]
    %v331 = vld [vmem:[%s2 + $0x10] sm:$0xff]
    %v332 = vld [vmem:[%s2 + $0x18] sm:$0xff]
    %v333 = vld [vmem:[%s2 + $0x20] sm:$0xff]
    %v334 = vld [vmem:[%s2 + $0x28] sm:$0xff]
    %v335 = vld [vmem:[%s2 + $0x30] sm:$0xff]
    %v336 = vld [vmem:[%s2 + $0x38] sm:$0xff]
    %v337 = vld [vmem:[%s2 + $0x40] sm:$0xff]
    %v338 = vld [vmem:[%s2 + $0x48] sm:$0xff]
    %v339 = vld [vmem:[%s2 + $0x50] sm:$0xff]
    %v340 = vld [vmem:[%s2 + $0x58] sm:$0xff]
    %v341 = vld [vmem:[%s2 + $0x60] sm:$0xff]
    %v342 = vld [vmem:[%s2 + $0x68] sm:$0xff]
    %v343 = vld [vmem:[%s2 + $0x70] sm:$0xff]
    %v344 = vld [vmem:[%s2 + $0x78] sm:$0xff]
    %v345 = vadd.f32 %v313, %v329
    %v346 = vadd.f32 %v314, %v330
    %v347 = vadd.f32 %v315, %v331
    %v348 = vadd.f32 %v316, %v332
    %v349 = vadd.f32 %v317, %v333
    %v350 = vadd.f32 %v318, %v334
    %v351 = vadd.f32 %v319, %v335
    %v352 = vadd.f32 %v320, %v336
    %v353 = vadd.f32 %v321, %v337
    %v354 = vadd.f32 %v322, %v338
    %v355 = vadd.f32 %v323, %v339
    %v356 = vadd.f32 %v324, %v340
    %v357 = vadd.f32 %v325, %v341
    %v358 = vadd.f32 %v326, %v342
    %v359 = vadd.f32 %v327, %v343
    %v360 = vadd.f32 %v328, %v344
    %v361 = vmax.f32 %v345, 0.0
    %v362 = vmax.f32 %v346, 0.0
    %v363 = vmax.f32 %v347, 0.0
    %v364 = vmax.f32 %v348, 0.0
    %v365 = vmax.f32 %v349, 0.0
    %v366 = vmax.f32 %v350, 0.0
    %v367 = vmax.f32 %v351, 0.0
    %v368 = vmax.f32 %v352, 0.0
    %v369 = vmax.f32 %v353, 0.0
    %v370 = vmax.f32 %v354, 0.0
    %v371 = vmax.f32 %v355, 0.0
    %v372 = vmax.f32 %v356, 0.0
    %v373 = vmax.f32 %v357, 0.0
    %v374 = vmax.f32 %v358, 0.0
    %v375 = vmax.f32 %v359, 0.0
    %v376 = vmax.f32 %v360, 0.0
    %v377 = vpack.c.bf16 %v362, %v361
    %v378 = vpack.c.bf16 %v364, %v363
    %v379 = vpack.c.bf16 %v366, %v365
    %v380 = vpack.c.bf16 %v368, %v367
    %v381 = vpack.c.bf16 %v370, %v369
    %v382 = vpack.c.bf16 %v372, %v371
    %v383 = vpack.c.bf16 %v374, %v373
    %v384 = vpack.c.bf16 %v376, %v375
    %v393 = vunpack.c.l.b16 %v377
    %v394 = vunpack.c.h.b16 %v377
    %v395 = vunpack.c.l.b16 %v378
    %v396 = vunpack.c.h.b16 %v378
    %v397 = vunpack.c.l.b16 %v379
    %v398 = vunpack.c.h.b16 %v379
    %v399 = vunpack.c.l.b16 %v380
    %v400 = vunpack.c.h.b16 %v380
    %v401 = vunpack.c.l.b16 %v381
    %v402 = vunpack.c.h.b16 %v381
    %v403 = vunpack.c.l.b16 %v382
    %v404 = vunpack.c.h.b16 %v382
    %v405 = vunpack.c.l.b16 %v383
    %v406 = vunpack.c.h.b16 %v383
    %v407 = vunpack.c.l.b16 %v384
    %v408 = vunpack.c.h.b16 %v384
    %v409 = vpack.c.b16 %v393, %v393
    %v410 = vpack.c.b16 %v394, %v394
    %v411 = vpack.c.b16 %v395, %v395
    %v412 = vpack.c.b16 %v396, %v396
    %v413 = vpack.c.b16 %v397, %v397
    %v414 = vpack.c.b16 %v398, %v398
    %v415 = vpack.c.b16 %v399, %v399
    %v416 = vpack.c.b16 %v400, %v400
    %v417 = vpack.c.b16 %v401, %v401
    %v418 = vpack.c.b16 %v402, %v402
    %v419 = vpack.c.b16 %v403, %v403
    %v420 = vpack.c.b16 %v404, %v404
    %v421 = vpack.c.b16 %v405, %v405
    %v422 = vpack.c.b16 %v406, %v406
    %v423 = vpack.c.b16 %v407, %v407
    %v424 = vpack.c.b16 %v408, %v408
    %vm441 = vcmask 125952
    %442 = vst.msk [vmem:[%s3] sm:$0xf] %vm441, %v409
    %443 = vst.msk [vmem:[%s3 + $0x4] sm:$0xf] %vm441, %v410
    %444 = vst.msk [vmem:[%s3 + $0x8] sm:$0xf] %vm441, %v411
    %445 = vst.msk [vmem:[%s3 + $0xc] sm:$0xf] %vm441, %v412
    %446 = vst.msk [vmem:[%s3 + $0x10] sm:$0xf] %vm441, %v413
    %447 = vst.msk [vmem:[%s3 + $0x14] sm:$0xf] %vm441, %v414
    %448 = vst.msk [vmem:[%s3 + $0x18] sm:$0xf] %vm441, %v415
    %449 = vst.msk [vmem:[%s3 + $0x1c] sm:$0xf] %vm441, %v416
    %450 = vst.msk [vmem:[%s3 + $0x20] sm:$0xf] %vm441, %v417
    %451 = vst.msk [vmem:[%s3 + $0x24] sm:$0xf] %vm441, %v418
    %452 = vst.msk [vmem:[%s3 + $0x28] sm:$0xf] %vm441, %v419
    %453 = vst.msk [vmem:[%s3 + $0x2c] sm:$0xf] %vm441, %v420
    %454 = vst.msk [vmem:[%s3 + $0x30] sm:$0xf] %vm441, %v421
    %455 = vst.msk [vmem:[%s3 + $0x34] sm:$0xf] %vm441, %v422
    %456 = vst.msk [vmem:[%s3 + $0x38] sm:$0xf] %vm441, %v423
    %457 = vst.msk [vmem:[%s3 + $0x3c] sm:$0xf] %vm441, %v424
  $region21: #{tpu_custom_call.1} parent=0 // pred_fallthru
    _
  // Predicated region
  $region22: #{tpu_custom_call.1} parent=0 // pred_check
    _
  $region23: #{tpu_custom_call.1} parent=0 // pred_check_branch
    %459 = sbr.rel (0) target = $region25
  $region24: #{tpu_custom_call.1} parent=0 // pred_region
    _
  $region25: #{tpu_custom_call.1} parent=0 // pred_fallthru
    _
  // Predicated region
  $region26: #{tpu_custom_call.1} parent=0 // pred_check
    _
  $region27: #{tpu_custom_call.1} parent=0 // pred_check_branch
    %461 = sbr.rel (0) target = $region29
  $region28: #{tpu_custom_call.1} parent=0 // pred_region
    _
  $region29: #{tpu_custom_call.1} parent=0 // pred_fallthru
    _

</llo_original>
